<compile_context>
chip_gen: v7x
topology: tpu7x:2x2x1
jax: 0.10.0
libtpu: 0.0.40
codegen_flags: <defaults>
</compile_context>

<pallas_src>
import jax
import jax.numpy as jnp
from jax.experimental import pallas as pl
from jax.experimental.pallas import tpu as pltpu

LN_EPS = 1e-5
MAX_TILE_B = 2048  # multiple of 8; per-step activation tiles stay tiny even on v7x


# ----------------------------- kernel ---------------------------------------

def _ln_halves(h, gamma, beta, half):
    """LayerNorm applied independently to lanes [0:half] and [half:2*half].

    Two-pass (mean, then centered variance) in f32.  Second-half sums are
    derived by subtraction from the full-width sums to save a masking pass.
    """
    d = h.shape[-1]  # == 2 * half
    lane = jax.lax.broadcasted_iota(jnp.int32, (1, d), 1)
    in_first = lane < half
    inv = 1.0 / float(half)

    h_first = jnp.where(in_first, h, 0.0)
    sum_all = jnp.sum(h, axis=-1, keepdims=True)
    sum_first = jnp.sum(h_first, axis=-1, keepdims=True)
    mean = jnp.where(in_first, sum_first * inv, (sum_all - sum_first) * inv)

    c = h - mean                                   # centered per respective half
    c_first = jnp.where(in_first, c, 0.0)
    ss_all = jnp.sum(c * c, axis=-1, keepdims=True)
    ss_first = jnp.sum(c_first * c_first, axis=-1, keepdims=True)
    var = jnp.where(in_first, ss_first * inv, (ss_all - ss_first) * inv)

    return c * jax.lax.rsqrt(var + LN_EPS) * gamma + beta


def make_fused_kernel(half_enc, h0, hidden_tail):
    """Builds the fused forward kernel for a given architecture."""
    n_hidden = len(hidden_tail)

    def vec(vec_ref, row, width):
        # Static (1, width) slice out of the packed f32 vector slab.
        return vec_ref[row:row + 1, 0:width]

    def kernel(state_ref, action_ref, vec_ref, w_s_ref, w_a_ref, *rest):
        # rest = (w_hidden_0, ..., w_hidden_{n-1}, w_f, out)
        w_hidden = rest[:n_hidden]
        w_f_ref = rest[n_hidden]
        out_ref = rest[n_hidden + 1]

        # --- fused state/action encoders: two bf16 MXU dots into disjoint
        #     lane halves of the same h0-wide tile (weights zero-padded), add.
        xs = jnp.dot(state_ref[...].astype(jnp.bfloat16), w_s_ref[...],
                     preferred_element_type=jnp.float32)
        xa = jnp.dot(action_ref[...].astype(jnp.bfloat16), w_a_ref[...],
                     preferred_element_type=jnp.float32)
        x = xs + xa + vec(vec_ref, 0, h0)
        x = jnp.maximum(x, 0.0)
        x = _ln_halves(x, vec(vec_ref, 1, h0), vec(vec_ref, 2, h0), half_enc)

        # --- joint q1/q2 hidden stacks (Linear -> ReLU -> per-head LN)
        row = 3
        h = x
        for i in range(n_hidden):
            d = 2 * hidden_tail[i]
            h = jnp.dot(h.astype(jnp.bfloat16), w_hidden[i][...],
                        preferred_element_type=jnp.float32)
            h = h + vec(vec_ref, row, d)
            h = jnp.maximum(h, 0.0)
            h = _ln_halves(h, vec(vec_ref, row + 1, d), vec(vec_ref, row + 2, d),
                           hidden_tail[i])
            row += 3
            # TODO(synk): training-mode Dropout(0.1) omitted (eval/inference
            # semantics); would need pltpu.prng_seed/prng_random_bits masking.

        # --- joint final Linear (block-diag, bf16) -> (tile_b, 2)
        out_ref[...] = (jnp.dot(h.astype(jnp.bfloat16), w_f_ref[...],
                                preferred_element_type=jnp.float32)
                        + vec(vec_ref, row, 2))

    return kernel


# --------------------------- parameter setup ---------------------------------

def orthogonal_init(key, out_dim, in_dim):
    """Deterministic orthogonal init (matches nn.init.orthogonal_ semantics)."""
    tall = (max(out_dim, in_dim), min(out_dim, in_dim))
    a = jax.random.normal(key, tall, dtype=jnp.float32)
    q, r = jnp.linalg.qr(a)
    q = q * jnp.sign(jnp.diagonal(r))
    if out_dim < in_dim:
        q = q.T
    return q.astype(jnp.float32)  # [out_dim, in_dim]


def make_linear(key, in_dim, out_dim):
    w = orthogonal_init(key, out_dim, in_dim)  # [out, in] (PyTorch convention)
    b = jnp.zeros((out_dim,), jnp.float32)
    return w.T, b.reshape(1, out_dim)          # kernel-friendly: [in,out], [1,out]


def make_layernorm(dim):
    return jnp.ones((1, dim), jnp.float32), jnp.zeros((1, dim), jnp.float32)


def init_critic_params(key, state_dim, action_dim, hidden_dims):
    half = hidden_dims[0] // 2
    keys = iter(jax.random.split(key, 64))
    params = {}
    params["state_enc"] = (*make_linear(next(keys), state_dim, half),
                           *make_layernorm(half))
    params["action_enc"] = (*make_linear(next(keys), action_dim, half),
                            *make_layernorm(half))
    for head in ("q1", "q2"):
        layers = []
        prev = hidden_dims[0]
        for h in hidden_dims[1:]:
            layers.append((*make_linear(next(keys), prev, h), *make_layernorm(h)))
            prev = h
        final = make_linear(next(keys), prev, 1)
        params[head] = (layers, final)
    return params


def pack_critic_params(params, state_dim, action_dim, hidden_dims):
    """Pack raw params into bf16 joint/block-diag weights + one f32 vector slab."""
    half = hidden_dims[0] // 2
    h0 = hidden_dims[0]

    ws, bs, gs, bts = params["state_enc"]   # ws: (state_dim, half)
    wa, ba, ga, bta = params["action_enc"]  # wa: (action_dim, half)

    # Padded encoder weights so state/action inputs never need concatenating:
    #   state  @ w_s  -> lanes [0:half],  action @ w_a -> lanes [half:h0].
    w_s = jnp.zeros((state_dim, h0), jnp.float32).at[:, :half].set(ws)
    w_a = jnp.zeros((action_dim, h0), jnp.float32).at[:, half:].set(wa)

    vecs = [jnp.concatenate([bs, ba], axis=1),
            jnp.concatenate([gs, ga], axis=1),
            jnp.concatenate([bts, bta], axis=1)]

    q1_layers, (wf1, bf1) = params["q1"]
    q2_layers, (wf2, bf2) = params["q2"]

    w_hidden = []
    prev = h0
    for i, hdim in enumerate(hidden_dims[1:]):
        w1, b1, g1, bt1 = q1_layers[i]
        w2, b2, g2, bt2 = q2_layers[i]
        if i == 0:
            w = jnp.concatenate([w1, w2], axis=1)             # shared input x
        else:
            w = jnp.zeros((2 * prev, 2 * hdim), jnp.float32)  # block-diagonal
            w = w.at[:prev, :hdim].set(w1)
            w = w.at[prev:, hdim:].set(w2)
        w_hidden.append(w.astype(jnp.bfloat16))
        vecs.extend([jnp.concatenate([b1, b2], axis=1),
                     jnp.concatenate([g1, g2], axis=1),
                     jnp.concatenate([bt1, bt2], axis=1)])
        prev = hdim

    if len(hidden_dims) > 1:
        w_f = jnp.zeros((2 * prev, 2), jnp.float32)
        w_f = w_f.at[:prev, 0:1].set(wf1)
        w_f = w_f.at[prev:, 1:2].set(wf2)
    else:
        w_f = jnp.concatenate([wf1, wf2], axis=1)             # heads share x
    vecs.append(jnp.concatenate([bf1, bf2], axis=1))

    max_w = max(v.shape[1] for v in vecs)
    slab = jnp.zeros((len(vecs), max_w), jnp.float32)
    for i, v in enumerate(vecs):
        slab = slab.at[i, :v.shape[1]].set(v[0])

    return {"w_s": w_s.astype(jnp.bfloat16),
            "w_a": w_a.astype(jnp.bfloat16),
            "w_hidden": tuple(w_hidden),
            "w_f": w_f.astype(jnp.bfloat16),
            "vec_slab": slab}


# ------------------------------ forward --------------------------------------

def _pick_tile_b(batch):
    if batch <= 8:
        return batch
    # At least 2 grid steps so the "parallel" axis can shard across both v7x
    # TensorCores; tile rounded to sublane multiple and capped at MAX_TILE_B.
    tile = 8 * pl.cdiv(batch // 2, 8)
    return min(tile, MAX_TILE_B)


def build_critic_forward(state_dim, action_dim, hidden_dims):
    half = hidden_dims[0] // 2
    h0 = hidden_dims[0]
    hidden_tail = tuple(hidden_dims[1:])
    kernel = make_fused_kernel(half, h0, hidden_tail)

    @jax.jit
    def forward(packed, state, action):
        batch = state.shape[0]
        w_s, w_a = packed["w_s"], packed["w_a"]
        w_hidden = packed["w_hidden"]
        w_f = packed["w_f"]
        slab = packed["vec_slab"]

        tile_b = _pick_tile_b(batch)
        grid = (pl.cdiv(batch, tile_b),)

        def resident(arr):
            nd = arr.ndim
            return pl.BlockSpec(arr.shape, lambda i: (0,) * nd)

        in_specs = [pl.BlockSpec((tile_b, state_dim), lambda i: (i, 0)),
                    pl.BlockSpec((tile_b, action_dim), lambda i: (i, 0)),
                    resident(slab),
                    resident(w_s),
                    resident(w_a)]
        in_specs += [resident(w) for w in w_hidden]
        in_specs += [resident(w_f)]

        out = pl.pallas_call(
            kernel,
            grid=grid,
            in_specs=in_specs,
            out_specs=pl.BlockSpec((tile_b, 2), lambda i: (i, 0)),
            out_shape=jax.ShapeDtypeStruct((batch, 2), jnp.float32),
            compiler_params=pltpu.CompilerParams(
                dimension_semantics=("parallel",)),
        )(state, action, slab, w_s, w_a, *w_hidden, w_f)
        return out[:, 0:1], out[:, 1:2]

    return forward


# Pure-JAX reference on raw (unpacked) params.  matmul_dtype=f32 gives the
# exact PyTorch-module semantics; matmul_dtype=bf16 mirrors the kernel's
# bf16-operand / f32-accumulate MXU numerics for a tight correctness check.
def critic_forward_ref(params, state, action, matmul_dtype=jnp.float32):
    def lin(x, w, b):
        return jnp.dot(x.astype(matmul_dtype), w.astype(matmul_dtype),
                       preferred_element_type=jnp.float32) + b

    def ln(x, g, b):
        m = jnp.mean(x, axis=-1, keepdims=True)
        v = jnp.mean((x - m) ** 2, axis=-1, keepdims=True)
        return (x - m) * jax.lax.rsqrt(v + LN_EPS) * g + b

    ws, bs, gs, bts = params["state_enc"]
    wa, ba, ga, bta = params["action_enc"]
    s = ln(jnp.maximum(lin(state, ws, bs), 0.0), gs, bts)
    a = ln(jnp.maximum(lin(action, wa, ba), 0.0), ga, bta)
    x = jnp.concatenate([s, a], axis=1)
    outs = []
    for head in ("q1", "q2"):
        layers, (wf, bf) = params[head]
        q = x
        for (w, b, g, bt) in layers:
            q = ln(jnp.maximum(lin(q, w, b), 0.0), g, bt)
        outs.append(lin(q, wf, bf))
    return tuple(outs)


# -------------------------------- main ----------------------------------------

if __name__ == "__main__":
    batch = 8
    state_dim = 16
    action_dim = 8
    hidden_dims = [32, 32, 32]

    key = jax.random.PRNGKey(0)
    k_param, k_state, k_action = jax.random.split(key, 3)

    raw_params = init_critic_params(k_param, state_dim, action_dim, hidden_dims)
    packed_params = pack_critic_params(raw_params, state_dim, action_dim,
                                       hidden_dims)

    state = jax.random.normal(k_state, (batch, state_dim), dtype=jnp.float32)
    action = jax.random.normal(k_action, (batch, action_dim), dtype=jnp.float32)

    critic_forward = build_critic_forward(state_dim, action_dim, hidden_dims)
    q1, q2 = critic_forward(packed_params, state, action)
    jax.block_until_ready((q1, q2))

    assert q1.shape == (batch, 1) and q2.shape == (batch, 1)

    # Tight check vs. a reference that mirrors the kernel's bf16-matmul numerics.
    q1_b, q2_b = critic_forward_ref(raw_params, state, action, jnp.bfloat16)
    assert jnp.allclose(q1, q1_b, atol=2e-2, rtol=2e-2)
    assert jnp.allclose(q2, q2_b, atol=2e-2, rtol=2e-2)

    # Looser sanity check vs. the exact f32 PyTorch-module semantics.
    q1_f, q2_f = critic_forward_ref(raw_params, state, action, jnp.float32)
    assert jnp.allclose(q1, q1_f, atol=1e-1, rtol=1e-1)
    assert jnp.allclose(q2, q2_f, atol=1e-1, rtol=1e-1)

    print("KERNEL_OK")
</pallas_src>

<mosaic_0001>
module attributes {stable_mosaic.version = 11 : i64} {
  func.func @kernel(%arg0: i32, %arg1: memref<8x16xf32, #tpu.memory_space<vmem>>, %arg2: memref<8x8xf32, #tpu.memory_space<vmem>>, %arg3: memref<10x64xf32, #tpu.memory_space<vmem>>, %arg4: memref<16x32xbf16, #tpu.memory_space<vmem>>, %arg5: memref<8x32xbf16, #tpu.memory_space<vmem>>, %arg6: memref<32x64xbf16, #tpu.memory_space<vmem>>, %arg7: memref<64x64xbf16, #tpu.memory_space<vmem>>, %arg8: memref<64x2xbf16, #tpu.memory_space<vmem>>, %arg9: memref<8x2xf32, #tpu.memory_space<vmem>>) attributes {dimension_semantics = [#tpu.dimension_semantics<parallel>], iteration_bounds = array<i64: 1>, scalar_prefetch = 0 : i64, scratch_operands = 0 : i64, tpu.core_type = #tpu.core_type<tc>, window_params = [{transform_indices = @transform_0, window_bounds = array<i64: 8, 16>}, {transform_indices = @transform_1, window_bounds = array<i64: 8, 8>}, {pipeline_mode = #tpu.pipeline_mode<synchronous>, transform_indices = @transform_2, window_bounds = array<i64: 10, 64>}, {pipeline_mode = #tpu.pipeline_mode<synchronous>, transform_indices = @transform_3, window_bounds = array<i64: 16, 32>}, {pipeline_mode = #tpu.pipeline_mode<synchronous>, transform_indices = @transform_4, window_bounds = array<i64: 8, 32>}, {pipeline_mode = #tpu.pipeline_mode<synchronous>, transform_indices = @transform_5, window_bounds = array<i64: 32, 64>}, {pipeline_mode = #tpu.pipeline_mode<synchronous>, transform_indices = @transform_6, window_bounds = array<i64: 64, 64>}, {pipeline_mode = #tpu.pipeline_mode<synchronous>, transform_indices = @transform_7, window_bounds = array<i64: 64, 2>}, {transform_indices = @transform_8, window_bounds = array<i64: 8, 2>}]} {
    %c0 = arith.constant 0 : index
    %c0_0 = arith.constant 0 : index
    %0 = vector.load %arg1[%c0, %c0_0] : memref<8x16xf32, #tpu.memory_space<vmem>>, vector<8x16xf32>
    %1 = arith.truncf %0 : vector<8x16xf32> to vector<8x16xbf16>
    %c0_1 = arith.constant 0 : index
    %c0_2 = arith.constant 0 : index
    %2 = vector.load %arg4[%c0_1, %c0_2] : memref<16x32xbf16, #tpu.memory_space<vmem>>, vector<16x32xbf16>
    %cst = arith.constant dense<0.000000e+00> : vector<8x32xf32>
    %3 = tpu.matmul %1, %2, %cst {dimension_numbers = #tpu.dot_dimension_numbers<[1], [0], [0], [1], [0, 0, 1, 1], [], []>} : vector<8x16xbf16>, vector<16x32xbf16>, vector<8x32xf32> -> vector<8x32xf32>
    %c0_3 = arith.constant 0 : index
    %c0_4 = arith.constant 0 : index
    %4 = vector.load %arg2[%c0_3, %c0_4] : memref<8x8xf32, #tpu.memory_space<vmem>>, vector<8x8xf32>
    %5 = arith.truncf %4 : vector<8x8xf32> to vector<8x8xbf16>
    %c0_5 = arith.constant 0 : index
    %c0_6 = arith.constant 0 : index
    %6 = vector.load %arg5[%c0_5, %c0_6] : memref<8x32xbf16, #tpu.memory_space<vmem>>, vector<8x32xbf16>
    %cst_7 = arith.constant dense<0.000000e+00> : vector<8x32xf32>
    %7 = tpu.matmul %5, %6, %cst_7 {dimension_numbers = #tpu.dot_dimension_numbers<[1], [0], [0], [1], [0, 0, 1, 1], [], []>} : vector<8x8xbf16>, vector<8x32xbf16>, vector<8x32xf32> -> vector<8x32xf32>
    %8 = arith.addf %3, %7 : vector<8x32xf32>
    %c0_8 = arith.constant 0 : index
    %c0_9 = arith.constant 0 : index
    %9 = vector.load %arg3[%c0_8, %c0_9] : memref<10x64xf32, #tpu.memory_space<vmem>>, vector<1x32xf32>
    %10 = vector.broadcast %9 : vector<1x32xf32> to vector<8x32xf32>
    %11 = arith.addf %8, %10 : vector<8x32xf32>
    %cst_10 = arith.constant 0.000000e+00 : f32
    %12 = vector.broadcast %cst_10 : f32 to vector<8x32xf32>
    %13 = arith.maximumf %11, %12 : vector<8x32xf32>
    %c1 = arith.constant 1 : index
    %c0_11 = arith.constant 0 : index
    %14 = vector.load %arg3[%c1, %c0_11] : memref<10x64xf32, #tpu.memory_space<vmem>>, vector<1x32xf32>
    %c2 = arith.constant 2 : index
    %c0_12 = arith.constant 0 : index
    %15 = vector.load %arg3[%c2, %c0_12] : memref<10x64xf32, #tpu.memory_space<vmem>>, vector<1x32xf32>
    %16 = tpu.iota {dimensions = array<i32: 1>} : vector<1x32xi32>
    %c16_i32 = arith.constant 16 : i32
    %17 = vector.broadcast %c16_i32 : i32 to vector<1x32xi32>
    %18 = arith.cmpi slt, %16, %17 : vector<1x32xi32>
    %cst_13 = arith.constant 0.000000e+00 : f32
    %19 = vector.shape_cast %18 : vector<1x32xi1> to vector<1x32xi1>
    %20 = vector.broadcast %19 : vector<1x32xi1> to vector<8x32xi1>
    %21 = vector.broadcast %cst_13 : f32 to vector<8x32xf32>
    %22 = arith.select %20, %13, %21 : vector<8x32xi1>, vector<8x32xf32>
    %cst_14 = arith.constant dense<0.000000e+00> : vector<8xf32>
    %23 = vector.multi_reduction <add>, %13, %cst_14 [1] : vector<8x32xf32> to vector<8xf32>
    %24 = vector.shape_cast %23 : vector<8xf32> to vector<8x1xf32>
    %cst_15 = arith.constant dense<0.000000e+00> : vector<8xf32>
    %25 = vector.multi_reduction <add>, %22, %cst_15 [1] : vector<8x32xf32> to vector<8xf32>
    %26 = vector.shape_cast %25 : vector<8xf32> to vector<8x1xf32>
    %cst_16 = arith.constant 6.250000e-02 : f32
    %27 = vector.broadcast %cst_16 : f32 to vector<8x1xf32>
    %28 = arith.mulf %26, %27 : vector<8x1xf32>
    %29 = arith.subf %24, %26 : vector<8x1xf32>
    %cst_17 = arith.constant 6.250000e-02 : f32
    %30 = vector.broadcast %cst_17 : f32 to vector<8x1xf32>
    %31 = arith.mulf %29, %30 : vector<8x1xf32>
    %32 = vector.shape_cast %18 : vector<1x32xi1> to vector<1x32xi1>
    %33 = vector.broadcast %32 : vector<1x32xi1> to vector<8x32xi1>
    %34 = vector.shape_cast %28 : vector<8x1xf32> to vector<8x1xf32>
    %35 = vector.broadcast %34 : vector<8x1xf32> to vector<8x32xf32>
    %36 = vector.shape_cast %31 : vector<8x1xf32> to vector<8x1xf32>
    %37 = vector.broadcast %36 : vector<8x1xf32> to vector<8x32xf32>
    %38 = arith.select %33, %35, %37 : vector<8x32xi1>, vector<8x32xf32>
    %39 = arith.subf %13, %38 : vector<8x32xf32>
    %cst_18 = arith.constant 0.000000e+00 : f32
    %40 = vector.shape_cast %18 : vector<1x32xi1> to vector<1x32xi1>
    %41 = vector.broadcast %40 : vector<1x32xi1> to vector<8x32xi1>
    %42 = vector.broadcast %cst_18 : f32 to vector<8x32xf32>
    %43 = arith.select %41, %39, %42 : vector<8x32xi1>, vector<8x32xf32>
    %44 = arith.mulf %39, %39 : vector<8x32xf32>
    %cst_19 = arith.constant dense<0.000000e+00> : vector<8xf32>
    %45 = vector.multi_reduction <add>, %44, %cst_19 [1] : vector<8x32xf32> to vector<8xf32>
    %46 = vector.shape_cast %45 : vector<8xf32> to vector<8x1xf32>
    %47 = arith.mulf %43, %43 : vector<8x32xf32>
    %cst_20 = arith.constant dense<0.000000e+00> : vector<8xf32>
    %48 = vector.multi_reduction <add>, %47, %cst_20 [1] : vector<8x32xf32> to vector<8xf32>
    %49 = vector.shape_cast %48 : vector<8xf32> to vector<8x1xf32>
    %cst_21 = arith.constant 6.250000e-02 : f32
    %50 = vector.broadcast %cst_21 : f32 to vector<8x1xf32>
    %51 = arith.mulf %49, %50 : vector<8x1xf32>
    %52 = arith.subf %46, %49 : vector<8x1xf32>
    %cst_22 = arith.constant 6.250000e-02 : f32
    %53 = vector.broadcast %cst_22 : f32 to vector<8x1xf32>
    %54 = arith.mulf %52, %53 : vector<8x1xf32>
    %55 = vector.shape_cast %18 : vector<1x32xi1> to vector<1x32xi1>
    %56 = vector.broadcast %55 : vector<1x32xi1> to vector<8x32xi1>
    %57 = vector.shape_cast %51 : vector<8x1xf32> to vector<8x1xf32>
    %58 = vector.broadcast %57 : vector<8x1xf32> to vector<8x32xf32>
    %59 = vector.shape_cast %54 : vector<8x1xf32> to vector<8x1xf32>
    %60 = vector.broadcast %59 : vector<8x1xf32> to vector<8x32xf32>
    %61 = arith.select %56, %58, %60 : vector<8x32xi1>, vector<8x32xf32>
    %cst_23 = arith.constant 9.99999974E-6 : f32
    %62 = vector.broadcast %cst_23 : f32 to vector<8x32xf32>
    %63 = arith.addf %61, %62 : vector<8x32xf32>
    %64 = math.rsqrt %63 : vector<8x32xf32>
    %65 = arith.mulf %39, %64 : vector<8x32xf32>
    %66 = vector.broadcast %14 : vector<1x32xf32> to vector<8x32xf32>
    %67 = arith.mulf %65, %66 : vector<8x32xf32>
    %68 = vector.broadcast %15 : vector<1x32xf32> to vector<8x32xf32>
    %69 = arith.addf %67, %68 : vector<8x32xf32>
    %70 = arith.truncf %69 : vector<8x32xf32> to vector<8x32xbf16>
    %c0_24 = arith.constant 0 : index
    %c0_25 = arith.constant 0 : index
    %71 = vector.load %arg6[%c0_24, %c0_25] : memref<32x64xbf16, #tpu.memory_space<vmem>>, vector<32x64xbf16>
    %cst_26 = arith.constant dense<0.000000e+00> : vector<8x64xf32>
    %72 = tpu.matmul %70, %71, %cst_26 {dimension_numbers = #tpu.dot_dimension_numbers<[1], [0], [0], [1], [0, 0, 1, 1], [], []>} : vector<8x32xbf16>, vector<32x64xbf16>, vector<8x64xf32> -> vector<8x64xf32>
    %c3 = arith.constant 3 : index
    %c0_27 = arith.constant 0 : index
    %73 = vector.load %arg3[%c3, %c0_27] : memref<10x64xf32, #tpu.memory_space<vmem>>, vector<1x64xf32>
    %74 = vector.broadcast %73 : vector<1x64xf32> to vector<8x64xf32>
    %75 = arith.addf %72, %74 : vector<8x64xf32>
    %cst_28 = arith.constant 0.000000e+00 : f32
    %76 = vector.broadcast %cst_28 : f32 to vector<8x64xf32>
    %77 = arith.maximumf %75, %76 : vector<8x64xf32>
    %c4 = arith.constant 4 : index
    %c0_29 = arith.constant 0 : index
    %78 = vector.load %arg3[%c4, %c0_29] : memref<10x64xf32, #tpu.memory_space<vmem>>, vector<1x64xf32>
    %c5 = arith.constant 5 : index
    %c0_30 = arith.constant 0 : index
    %79 = vector.load %arg3[%c5, %c0_30] : memref<10x64xf32, #tpu.memory_space<vmem>>, vector<1x64xf32>
    %80 = tpu.iota {dimensions = array<i32: 1>} : vector<1x64xi32>
    %c32_i32 = arith.constant 32 : i32
    %81 = vector.broadcast %c32_i32 : i32 to vector<1x64xi32>
    %82 = arith.cmpi slt, %80, %81 : vector<1x64xi32>
    %cst_31 = arith.constant 0.000000e+00 : f32
    %83 = vector.shape_cast %82 : vector<1x64xi1> to vector<1x64xi1>
    %84 = vector.broadcast %83 : vector<1x64xi1> to vector<8x64xi1>
    %85 = vector.broadcast %cst_31 : f32 to vector<8x64xf32>
    %86 = arith.select %84, %77, %85 : vector<8x64xi1>, vector<8x64xf32>
    %cst_32 = arith.constant dense<0.000000e+00> : vector<8xf32>
    %87 = vector.multi_reduction <add>, %77, %cst_32 [1] : vector<8x64xf32> to vector<8xf32>
    %88 = vector.shape_cast %87 : vector<8xf32> to vector<8x1xf32>
    %cst_33 = arith.constant dense<0.000000e+00> : vector<8xf32>
    %89 = vector.multi_reduction <add>, %86, %cst_33 [1] : vector<8x64xf32> to vector<8xf32>
    %90 = vector.shape_cast %89 : vector<8xf32> to vector<8x1xf32>
    %cst_34 = arith.constant 3.125000e-02 : f32
    %91 = vector.broadcast %cst_34 : f32 to vector<8x1xf32>
    %92 = arith.mulf %90, %91 : vector<8x1xf32>
    %93 = arith.subf %88, %90 : vector<8x1xf32>
    %cst_35 = arith.constant 3.125000e-02 : f32
    %94 = vector.broadcast %cst_35 : f32 to vector<8x1xf32>
    %95 = arith.mulf %93, %94 : vector<8x1xf32>
    %96 = vector.shape_cast %82 : vector<1x64xi1> to vector<1x64xi1>
    %97 = vector.broadcast %96 : vector<1x64xi1> to vector<8x64xi1>
    %98 = vector.shape_cast %92 : vector<8x1xf32> to vector<8x1xf32>
    %99 = vector.broadcast %98 : vector<8x1xf32> to vector<8x64xf32>
    %100 = vector.shape_cast %95 : vector<8x1xf32> to vector<8x1xf32>
    %101 = vector.broadcast %100 : vector<8x1xf32> to vector<8x64xf32>
    %102 = arith.select %97, %99, %101 : vector<8x64xi1>, vector<8x64xf32>
    %103 = arith.subf %77, %102 : vector<8x64xf32>
    %cst_36 = arith.constant 0.000000e+00 : f32
    %104 = vector.shape_cast %82 : vector<1x64xi1> to vector<1x64xi1>
    %105 = vector.broadcast %104 : vector<1x64xi1> to vector<8x64xi1>
    %106 = vector.broadcast %cst_36 : f32 to vector<8x64xf32>
    %107 = arith.select %105, %103, %106 : vector<8x64xi1>, vector<8x64xf32>
    %108 = arith.mulf %103, %103 : vector<8x64xf32>
    %cst_37 = arith.constant dense<0.000000e+00> : vector<8xf32>
    %109 = vector.multi_reduction <add>, %108, %cst_37 [1] : vector<8x64xf32> to vector<8xf32>
    %110 = vector.shape_cast %109 : vector<8xf32> to vector<8x1xf32>
    %111 = arith.mulf %107, %107 : vector<8x64xf32>
    %cst_38 = arith.constant dense<0.000000e+00> : vector<8xf32>
    %112 = vector.multi_reduction <add>, %111, %cst_38 [1] : vector<8x64xf32> to vector<8xf32>
    %113 = vector.shape_cast %112 : vector<8xf32> to vector<8x1xf32>
    %cst_39 = arith.constant 3.125000e-02 : f32
    %114 = vector.broadcast %cst_39 : f32 to vector<8x1xf32>
    %115 = arith.mulf %113, %114 : vector<8x1xf32>
    %116 = arith.subf %110, %113 : vector<8x1xf32>
    %cst_40 = arith.constant 3.125000e-02 : f32
    %117 = vector.broadcast %cst_40 : f32 to vector<8x1xf32>
    %118 = arith.mulf %116, %117 : vector<8x1xf32>
    %119 = vector.shape_cast %82 : vector<1x64xi1> to vector<1x64xi1>
    %120 = vector.broadcast %119 : vector<1x64xi1> to vector<8x64xi1>
    %121 = vector.shape_cast %115 : vector<8x1xf32> to vector<8x1xf32>
    %122 = vector.broadcast %121 : vector<8x1xf32> to vector<8x64xf32>
    %123 = vector.shape_cast %118 : vector<8x1xf32> to vector<8x1xf32>
    %124 = vector.broadcast %123 : vector<8x1xf32> to vector<8x64xf32>
    %125 = arith.select %120, %122, %124 : vector<8x64xi1>, vector<8x64xf32>
    %cst_41 = arith.constant 9.99999974E-6 : f32
    %126 = vector.broadcast %cst_41 : f32 to vector<8x64xf32>
    %127 = arith.addf %125, %126 : vector<8x64xf32>
    %128 = math.rsqrt %127 : vector<8x64xf32>
    %129 = arith.mulf %103, %128 : vector<8x64xf32>
    %130 = vector.broadcast %78 : vector<1x64xf32> to vector<8x64xf32>
    %131 = arith.mulf %129, %130 : vector<8x64xf32>
    %132 = vector.broadcast %79 : vector<1x64xf32> to vector<8x64xf32>
    %133 = arith.addf %131, %132 : vector<8x64xf32>
    %134 = arith.truncf %133 : vector<8x64xf32> to vector<8x64xbf16>
    %c0_42 = arith.constant 0 : index
    %c0_43 = arith.constant 0 : index
    %135 = vector.load %arg7[%c0_42, %c0_43] : memref<64x64xbf16, #tpu.memory_space<vmem>>, vector<64x64xbf16>
    %cst_44 = arith.constant dense<0.000000e+00> : vector<8x64xf32>
    %136 = tpu.matmul %134, %135, %cst_44 {dimension_numbers = #tpu.dot_dimension_numbers<[1], [0], [0], [1], [0, 0, 1, 1], [], []>} : vector<8x64xbf16>, vector<64x64xbf16>, vector<8x64xf32> -> vector<8x64xf32>
    %c6 = arith.constant 6 : index
    %c0_45 = arith.constant 0 : index
    %137 = vector.load %arg3[%c6, %c0_45] : memref<10x64xf32, #tpu.memory_space<vmem>>, vector<1x64xf32>
    %138 = vector.broadcast %137 : vector<1x64xf32> to vector<8x64xf32>
    %139 = arith.addf %136, %138 : vector<8x64xf32>
    %cst_46 = arith.constant 0.000000e+00 : f32
    %140 = vector.broadcast %cst_46 : f32 to vector<8x64xf32>
    %141 = arith.maximumf %139, %140 : vector<8x64xf32>
    %c7 = arith.constant 7 : index
    %c0_47 = arith.constant 0 : index
    %142 = vector.load %arg3[%c7, %c0_47] : memref<10x64xf32, #tpu.memory_space<vmem>>, vector<1x64xf32>
    %c8 = arith.constant 8 : index
    %c0_48 = arith.constant 0 : index
    %143 = vector.load %arg3[%c8, %c0_48] : memref<10x64xf32, #tpu.memory_space<vmem>>, vector<1x64xf32>
    %144 = tpu.iota {dimensions = array<i32: 1>} : vector<1x64xi32>
    %c32_i32_49 = arith.constant 32 : i32
    %145 = vector.broadcast %c32_i32_49 : i32 to vector<1x64xi32>
    %146 = arith.cmpi slt, %144, %145 : vector<1x64xi32>
    %cst_50 = arith.constant 0.000000e+00 : f32
    %147 = vector.shape_cast %146 : vector<1x64xi1> to vector<1x64xi1>
    %148 = vector.broadcast %147 : vector<1x64xi1> to vector<8x64xi1>
    %149 = vector.broadcast %cst_50 : f32 to vector<8x64xf32>
    %150 = arith.select %148, %141, %149 : vector<8x64xi1>, vector<8x64xf32>
    %cst_51 = arith.constant dense<0.000000e+00> : vector<8xf32>
    %151 = vector.multi_reduction <add>, %141, %cst_51 [1] : vector<8x64xf32> to vector<8xf32>
    %152 = vector.shape_cast %151 : vector<8xf32> to vector<8x1xf32>
    %cst_52 = arith.constant dense<0.000000e+00> : vector<8xf32>
    %153 = vector.multi_reduction <add>, %150, %cst_52 [1] : vector<8x64xf32> to vector<8xf32>
    %154 = vector.shape_cast %153 : vector<8xf32> to vector<8x1xf32>
    %cst_53 = arith.constant 3.125000e-02 : f32
    %155 = vector.broadcast %cst_53 : f32 to vector<8x1xf32>
    %156 = arith.mulf %154, %155 : vector<8x1xf32>
    %157 = arith.subf %152, %154 : vector<8x1xf32>
    %cst_54 = arith.constant 3.125000e-02 : f32
    %158 = vector.broadcast %cst_54 : f32 to vector<8x1xf32>
    %159 = arith.mulf %157, %158 : vector<8x1xf32>
    %160 = vector.shape_cast %146 : vector<1x64xi1> to vector<1x64xi1>
    %161 = vector.broadcast %160 : vector<1x64xi1> to vector<8x64xi1>
    %162 = vector.shape_cast %156 : vector<8x1xf32> to vector<8x1xf32>
    %163 = vector.broadcast %162 : vector<8x1xf32> to vector<8x64xf32>
    %164 = vector.shape_cast %159 : vector<8x1xf32> to vector<8x1xf32>
    %165 = vector.broadcast %164 : vector<8x1xf32> to vector<8x64xf32>
    %166 = arith.select %161, %163, %165 : vector<8x64xi1>, vector<8x64xf32>
    %167 = arith.subf %141, %166 : vector<8x64xf32>
    %cst_55 = arith.constant 0.000000e+00 : f32
    %168 = vector.shape_cast %146 : vector<1x64xi1> to vector<1x64xi1>
    %169 = vector.broadcast %168 : vector<1x64xi1> to vector<8x64xi1>
    %170 = vector.broadcast %cst_55 : f32 to vector<8x64xf32>
    %171 = arith.select %169, %167, %170 : vector<8x64xi1>, vector<8x64xf32>
    %172 = arith.mulf %167, %167 : vector<8x64xf32>
    %cst_56 = arith.constant dense<0.000000e+00> : vector<8xf32>
    %173 = vector.multi_reduction <add>, %172, %cst_56 [1] : vector<8x64xf32> to vector<8xf32>
    %174 = vector.shape_cast %173 : vector<8xf32> to vector<8x1xf32>
    %175 = arith.mulf %171, %171 : vector<8x64xf32>
    %cst_57 = arith.constant dense<0.000000e+00> : vector<8xf32>
    %176 = vector.multi_reduction <add>, %175, %cst_57 [1] : vector<8x64xf32> to vector<8xf32>
    %177 = vector.shape_cast %176 : vector<8xf32> to vector<8x1xf32>
    %cst_58 = arith.constant 3.125000e-02 : f32
    %178 = vector.broadcast %cst_58 : f32 to vector<8x1xf32>
    %179 = arith.mulf %177, %178 : vector<8x1xf32>
    %180 = arith.subf %174, %177 : vector<8x1xf32>
    %cst_59 = arith.constant 3.125000e-02 : f32
    %181 = vector.broadcast %cst_59 : f32 to vector<8x1xf32>
    %182 = arith.mulf %180, %181 : vector<8x1xf32>
    %183 = vector.shape_cast %146 : vector<1x64xi1> to vector<1x64xi1>
    %184 = vector.broadcast %183 : vector<1x64xi1> to vector<8x64xi1>
    %185 = vector.shape_cast %179 : vector<8x1xf32> to vector<8x1xf32>
    %186 = vector.broadcast %185 : vector<8x1xf32> to vector<8x64xf32>
    %187 = vector.shape_cast %182 : vector<8x1xf32> to vector<8x1xf32>
    %188 = vector.broadcast %187 : vector<8x1xf32> to vector<8x64xf32>
    %189 = arith.select %184, %186, %188 : vector<8x64xi1>, vector<8x64xf32>
    %cst_60 = arith.constant 9.99999974E-6 : f32
    %190 = vector.broadcast %cst_60 : f32 to vector<8x64xf32>
    %191 = arith.addf %189, %190 : vector<8x64xf32>
    %192 = math.rsqrt %191 : vector<8x64xf32>
    %193 = arith.mulf %167, %192 : vector<8x64xf32>
    %194 = vector.broadcast %142 : vector<1x64xf32> to vector<8x64xf32>
    %195 = arith.mulf %193, %194 : vector<8x64xf32>
    %196 = vector.broadcast %143 : vector<1x64xf32> to vector<8x64xf32>
    %197 = arith.addf %195, %196 : vector<8x64xf32>
    %198 = arith.truncf %197 : vector<8x64xf32> to vector<8x64xbf16>
    %c0_61 = arith.constant 0 : index
    %c0_62 = arith.constant 0 : index
    %199 = vector.load %arg8[%c0_61, %c0_62] : memref<64x2xbf16, #tpu.memory_space<vmem>>, vector<64x2xbf16>
    %cst_63 = arith.constant dense<0.000000e+00> : vector<8x2xf32>
    %200 = tpu.matmul %198, %199, %cst_63 {dimension_numbers = #tpu.dot_dimension_numbers<[1], [0], [0], [1], [0, 0, 1, 1], [], []>} : vector<8x64xbf16>, vector<64x2xbf16>, vector<8x2xf32> -> vector<8x2xf32>
    %c9 = arith.constant 9 : index
    %c0_64 = arith.constant 0 : index
    %201 = vector.load %arg3[%c9, %c0_64] : memref<10x64xf32, #tpu.memory_space<vmem>>, vector<1x2xf32>
    %202 = vector.broadcast %201 : vector<1x2xf32> to vector<8x2xf32>
    %203 = arith.addf %200, %202 : vector<8x2xf32>
    %c0_65 = arith.constant 0 : index
    %c0_66 = arith.constant 0 : index
    %204 = vector.load %arg9[%c0_65, %c0_66] : memref<8x2xf32, #tpu.memory_space<vmem>>, vector<8x2xf32>
    tpu.vector_store %arg9[%c0_65, %c0_66], %203 {strides = array<i32>} : memref<8x2xf32, #tpu.memory_space<vmem>>, vector<8x2xf32>,
    return
  }
  func.func @transform_0(%arg0: i32) -> (i32, i32) {
    %c0_i32 = arith.constant 0 : i32
    %c0_i32_0 = arith.constant 0 : i32
    return %arg0, %c0_i32 : i32, i32
  }
  func.func @transform_1(%arg0: i32) -> (i32, i32) {
    %c0_i32 = arith.constant 0 : i32
    %c0_i32_0 = arith.constant 0 : i32
    return %arg0, %c0_i32 : i32, i32
  }
  func.func @transform_2(%arg0: i32) -> (i32, i32) {
    %c0_i32 = arith.constant 0 : i32
    %c0_i32_0 = arith.constant 0 : i32
    %c0_i32_1 = arith.constant 0 : i32
    return %c0_i32, %c0_i32_0 : i32, i32
  }
  func.func @transform_3(%arg0: i32) -> (i32, i32) {
    %c0_i32 = arith.constant 0 : i32
    %c0_i32_0 = arith.constant 0 : i32
    %c0_i32_1 = arith.constant 0 : i32
    return %c0_i32, %c0_i32_0 : i32, i32
  }
  func.func @transform_4(%arg0: i32) -> (i32, i32) {
    %c0_i32 = arith.constant 0 : i32
    %c0_i32_0 = arith.constant 0 : i32
    %c0_i32_1 = arith.constant 0 : i32
    return %c0_i32, %c0_i32_0 : i32, i32
  }
  func.func @transform_5(%arg0: i32) -> (i32, i32) {
    %c0_i32 = arith.constant 0 : i32
    %c0_i32_0 = arith.constant 0 : i32
    %c0_i32_1 = arith.constant 0 : i32
    return %c0_i32, %c0_i32_0 : i32, i32
  }
  func.func @transform_6(%arg0: i32) -> (i32, i32) {
    %c0_i32 = arith.constant 0 : i32
    %c0_i32_0 = arith.constant 0 : i32
    %c0_i32_1 = arith.constant 0 : i32
    return %c0_i32, %c0_i32_0 : i32, i32
  }
  func.func @transform_7(%arg0: i32) -> (i32, i32) {
    %c0_i32 = arith.constant 0 : i32
    %c0_i32_0 = arith.constant 0 : i32
    %c0_i32_1 = arith.constant 0 : i32
    return %c0_i32, %c0_i32_0 : i32, i32
  }
  func.func @transform_8(%arg0: i32) -> (i32, i32) {
    %c0_i32 = arith.constant 0 : i32
    %c0_i32_0 = arith.constant 0 : i32
    return %arg0, %c0_i32 : i32, i32
  }
}

</mosaic_0001>

<llo_original>
// kernel: forward.1
$region0: #{forward.1}
  #allocation0 [shape = 'u32[]', space=smem, size = 0x4, offset = 0x4, fixed_abs, tag = 'smem constant byte address 0x4 - core index']
  #allocation1 [shape = 'u32[144,128]{1,0:T(1,128)}', space=vmem, size = 0x12000, scoped, tag = 'internal scratch']
  %s0 = inlined_call_operand.hbm [shape: f32[8,16], index: 0, kind: input, shape index: {}]
  %s1 = inlined_call_operand.vmem [shape: f32[8,8], index: 1, kind: input, shape index: {}]
  %s2 = inlined_call_operand.vmem [shape: f32[10,64], index: 2, kind: input, shape index: {}]
  %s3 = inlined_call_operand.hbm [shape: bf16[16,32], index: 3, kind: input, shape index: {}]
  %s4 = inlined_call_operand.hbm [shape: bf16[8,32], index: 4, kind: input, shape index: {}]
  %s5 = inlined_call_operand.hbm [shape: bf16[32,64], index: 5, kind: input, shape index: {}]
  %s6 = inlined_call_operand.vmem [shape: bf16[64,64], index: 6, kind: input, shape index: {}]
  %s7 = inlined_call_operand.vmem [shape: bf16[64,2], index: 7, kind: input, shape index: {}]
  %s8 = inlined_call_operand.vmem [shape: f32[8,2], index: 8, kind: output, shape index: {}]
  %s9 = sld [smem:[#allocation0]]
  $region58: #{forward.1} parent=0
    _
  %s11 = ssub.s32 1, %s9
  %s12 = scalar_select 0, %s11, %s9
  $region1: #{forward.1} parent=0
    #allocation2 [shape = 'u8[4096]{0}', space=vmem, size = 0x1000, scoped, tag = 'input window, operand 0, single buffered']
    #allocation3 [shape = 's32[1]{0}', space=sflag, size = 0x4, scoped, tag = 'scoped memory for forward.1']
    #allocation4 [shape = 'u8[4096]{0}', space=vmem, size = 0x1000, scoped, tag = 'input window, operand 3, single buffered']
    #allocation5 [shape = 's32[1]{0}', space=sflag, size = 0x4, scoped, tag = 'scoped memory for forward.1']
    #allocation6 [shape = 'u8[2048]{0}', space=vmem, size = 0x800, scoped, tag = 'input window, operand 4, single buffered']
    #allocation7 [shape = 'u8[8192]{0}', space=vmem, size = 0x2000, scoped, tag = 'input window, operand 5, single buffered']
    #allocation8 [shape = 's32[1]{0}', space=sflag, size = 0x4, scoped, tag = 'scoped memory for forward.1']
    %13 = vsyncpa [#allocation3], 0
    %14 = vsyncpa [#allocation5], 0
    %15 = vsyncpa [#allocation8], 0
    // Predicated region
    $region2: #{forward.1} parent=1 // pred_check
      _
    $region3: #{forward.1} parent=1 // pred_check_branch
      %17 = sbr.rel (0) target = $region5
    $region4: #{forward.1} parent=1 // pred_region
      %s19 = ssub.s32 128, 128
      %20 = vsyncadd [#allocation3], %s19
      %s22 = sshll.u32 [#allocation2], 4
      %s23 = int_to_ptr.vmem [resolvable:$true] %s22
      %25 = dma.hbm_to_vmem [thread:$0]  %s0, 128, %s23, [#allocation3]
    $region5: #{forward.1} parent=1 // pred_fallthru
      _
    // Predicated region
    $region6: #{forward.1} parent=1 // pred_check
      _
    $region7: #{forward.1} parent=1 // pred_check_branch
      %27 = sbr.rel (0) target = $region9
    $region8: #{forward.1} parent=1 // pred_region
      _
    $region9: #{forward.1} parent=1 // pred_fallthru
      _
    // Predicated region
    $region10: #{forward.1} parent=1 // pred_check
      _
    $region11: #{forward.1} parent=1 // pred_check_branch
      %29 = sbr.rel (0) target = $region13
    $region12: #{forward.1} parent=1 // pred_region
      _
    $region13: #{forward.1} parent=1 // pred_fallthru
      _
    // Predicated region
    $region14: #{forward.1} parent=1 // pred_check
      _
    $region15: #{forward.1} parent=1 // pred_check_branch
      %31 = sbr.rel (0) target = $region17
    $region16: #{forward.1} parent=1 // pred_region
      %s33 = ssub.s32 128, 128
      %34 = vsyncadd [#allocation5], %s33
      %s35 = sshll.u32 [#allocation4], 4
      %s36 = int_to_ptr.vmem [resolvable:$true] %s35
      %41 = dma.hbm_to_vmem [thread:$0]  %s3, 128, %s36, [#allocation5], 64, 64, 4
    $region17: #{forward.1} parent=1 // pred_fallthru
      _
    // Predicated region
    $region18: #{forward.1} parent=1 // pred_check
      _
    $region19: #{forward.1} parent=1 // pred_check_branch
      %43 = sbr.rel (0) target = $region21
    $region20: #{forward.1} parent=1 // pred_region
      %s45 = ssub.s32 64, 64
      %46 = vsyncadd [#allocation5], %s45
      %s48 = sshll.u32 [#allocation6], 4
      %s49 = int_to_ptr.vmem [resolvable:$true] %s48
      %51 = dma.hbm_to_vmem [thread:$0]  %s4, 64, %s49, [#allocation5]
    $region21: #{forward.1} parent=1 // pred_fallthru
      _
    // Predicated region
    $region22: #{forward.1} parent=1 // pred_check
      _
    $region23: #{forward.1} parent=1 // pred_check_branch
      %53 = sbr.rel (0) target = $region25
    $region24: #{forward.1} parent=1 // pred_region
      %s55 = ssub.s32 256, 256
      %56 = vsyncadd [#allocation8], %s55
      %s57 = sshll.u32 [#allocation7], 4
      %s58 = int_to_ptr.vmem [resolvable:$true] %s57
      %63 = dma.hbm_to_vmem [thread:$0]  %s5, 256, %s58, [#allocation8], 64, 64, 4
    $region25: #{forward.1} parent=1 // pred_fallthru
      _
    // Predicated region
    $region26: #{forward.1} parent=1 // pred_check
      _
    $region27: #{forward.1} parent=1 // pred_check_branch
      %65 = sbr.rel (0) target = $region29
    $region28: #{forward.1} parent=1 // pred_region
      _
    $region29: #{forward.1} parent=1 // pred_fallthru
      _
    // Predicated region
    $region30: #{forward.1} parent=1 // pred_check
      _
    $region31: #{forward.1} parent=1 // pred_check_branch
      %67 = sbr.rel (0) target = $region33
    $region32: #{forward.1} parent=1 // pred_region
      _
    $region33: #{forward.1} parent=1 // pred_fallthru
      _
    // Predicated region
    $region34: #{forward.1} parent=1 // pred_check
      _
    $region35: #{forward.1} parent=1 // pred_check_branch
      %69 = sbr.rel (0) target = $region37
    $region36: #{forward.1} parent=1 // pred_region
      %70 = dma.done [#allocation3], 128
    $region37: #{forward.1} parent=1 // pred_fallthru
      _
    // Predicated region
    $region38: #{forward.1} parent=1 // pred_check
      _
    $region39: #{forward.1} parent=1 // pred_check_branch
      %72 = sbr.rel (0) target = $region41
    $region40: #{forward.1} parent=1 // pred_region
      %73 = dma.done [#allocation5], 128
    $region41: #{forward.1} parent=1 // pred_fallthru
      _
    // Predicated region
    $region42: #{forward.1} parent=1 // pred_check
      _
    $region43: #{forward.1} parent=1 // pred_check_branch
      %75 = sbr.rel (0) target = $region45
    $region44: #{forward.1} parent=1 // pred_region
      %76 = dma.done [#allocation5], 64
    $region45: #{forward.1} parent=1 // pred_fallthru
      _
    // Predicated region
    $region46: #{forward.1} parent=1 // pred_check
      _
    $region47: #{forward.1} parent=1 // pred_check_branch
      %78 = sbr.rel (0) target = $region49
    $region48: #{forward.1} parent=1 // pred_region
      %79 = dma.done [#allocation8], 256
    $region49: #{forward.1} parent=1 // pred_fallthru
      _
    %v81 = vld [vmem:[#allocation2] sm:$0xff]
    %v82 = vpack.c.bf16 %v81, %v81
    %v83 = vld [vmem:[#allocation4] sm:$0xf]
    %v84 = vld [vmem:[#allocation4 + $0x4] sm:$0xf]
    %v85 = vld [vmem:[%s1] sm:$0xff]
    %v86 = vpack.c.bf16 %v85, %v85
    %v87 = vld [vmem:[#allocation6] sm:$0xf]
    %vm88 = vcmask 64512
    %v90 = vsel %vm88, %v86, 0
    %vm92 = vcmask 1043456
    %v94 = vsel %vm92, %v87, 0
    %96 = vmatprep.subr.bf16.mxu0 0
    %97 = vmatpush1.bf16.msra.mxu0 %v94
    %98 = vmatprep.subr.bf16.mxu0 0
    %99 = vmatpush1.bf16.msra.mxu0 0
    %100 = vmatprep.subr.bf16.mxu0 0
    %101 = vmatpush1.bf16.msra.mxu0 0
    %102 = vmatprep.subr.bf16.mxu0 0
    %103 = vmatpush1.bf16.msra.mxu0 0
    %104 = vmatprep.subr.bf16.mxu0 0
    %105 = vmatpush1.bf16.msra.mxu0 0
    %106 = vmatprep.subr.bf16.mxu0 0
    %107 = vmatpush1.bf16.msra.mxu0 0
    %108 = vmatprep.subr.bf16.mxu0 0
    %109 = vmatpush1.bf16.msra.mxu0 0
    %110 = vmatprep.subr.bf16.mxu0 0
    %111 = vmatpush1.bf16.msra.mxu0 0
    %112 = vmatprep.subr.bf16.mxu0 0
    %113 = vmatpush1.bf16.msra.mxu0 0
    %114 = vmatprep.subr.bf16.mxu0 0
    %115 = vmatpush1.bf16.msra.mxu0 0
    %116 = vmatprep.subr.bf16.mxu0 0
    %117 = vmatpush1.bf16.msra.mxu0 0
    %118 = vmatprep.subr.bf16.mxu0 0
    %119 = vmatpush1.bf16.msra.mxu0 0
    %120 = vmatprep.subr.bf16.mxu0 0
    %121 = vmatpush1.bf16.msra.mxu0 0
    %122 = vmatprep.subr.bf16.mxu0 0
    %123 = vmatpush1.bf16.msra.mxu0 0
    %124 = vmatprep.subr.bf16.mxu0 0
    %125 = vmatpush1.bf16.msra.mxu0 0
    %126 = vmatprep.subr.bf16.mxu0 0
    %127 = vmatpush1.bf16.msra.mxu0 0
    %128 = vmatprep.mubr.bf16.mxu0 0
    %129 = vmatmul.mubr.bf16.gmra.mrb[0].mxu0 %v90
    %v130 = vpop.f32.mrb[0].mxu0
    %v131 = vadd.f32 0.0, %v130
    %v132 = vpop.f32.mrb[0].mxu0
    %v133 = vpop.f32.mrb[0].mxu0
    %v134 = vpop.f32.mrb[0].mxu0
    %135 = vdwg.mxu0
    %v138 = vunpack.c.l.b16 %v83
    %v139 = vunpack.c.l.b16 %v84
    %v140 = vpack.c.b16 %v139, %v138
    %vm142 = vcmask 130048
    %v144 = vsel %vm142, %v82, 0
    %146 = vmatprep.subr.bf16.mxu0 0
    %147 = vmatpush1.bf16.msra.mxu0 %v140
    %148 = vmatprep.subr.bf16.mxu0 0
    %149 = vmatpush1.bf16.msra.mxu0 0
    %150 = vmatprep.subr.bf16.mxu0 0
    %151 = vmatpush1.bf16.msra.mxu0 0
    %152 = vmatprep.subr.bf16.mxu0 0
    %153 = vmatpush1.bf16.msra.mxu0 0
    %154 = vmatprep.subr.bf16.mxu0 0
    %155 = vmatpush1.bf16.msra.mxu0 0
    %156 = vmatprep.subr.bf16.mxu0 0
    %157 = vmatpush1.bf16.msra.mxu0 0
    %158 = vmatprep.subr.bf16.mxu0 0
    %159 = vmatpush1.bf16.msra.mxu0 0
    %160 = vmatprep.subr.bf16.mxu0 0
    %161 = vmatpush1.bf16.msra.mxu0 0
    %162 = vmatprep.subr.bf16.mxu0 0
    %163 = vmatpush1.bf16.msra.mxu0 0
    %164 = vmatprep.subr.bf16.mxu0 0
    %165 = vmatpush1.bf16.msra.mxu0 0
    %166 = vmatprep.subr.bf16.mxu0 0
    %167 = vmatpush1.bf16.msra.mxu0 0
    %168 = vmatprep.subr.bf16.mxu0 0
    %169 = vmatpush1.bf16.msra.mxu0 0
    %170 = vmatprep.subr.bf16.mxu0 0
    %171 = vmatpush1.bf16.msra.mxu0 0
    %172 = vmatprep.subr.bf16.mxu0 0
    %173 = vmatpush1.bf16.msra.mxu0 0
    %174 = vmatprep.subr.bf16.mxu0 0
    %175 = vmatpush1.bf16.msra.mxu0 0
    %176 = vmatprep.subr.bf16.mxu0 0
    %177 = vmatpush1.bf16.msra.mxu0 0
    %178 = vmatprep.mubr.bf16.mxu0 0
    %179 = vmatmul.mubr.bf16.gmra.mrb[0].mxu0 %v144
    %v180 = vpop.f32.mrb[0].mxu0
    %v181 = vadd.f32 %v131, %v180
    %v182 = vpop.f32.mrb[0].mxu0
    %v183 = vpop.f32.mrb[0].mxu0
    %v184 = vpop.f32.mrb[0].mxu0
    %185 = vdwg.mxu0
    %v186 = vld [vmem:[%s2] sm:$0x1]
    %v187 = vlaneseq
    %v188 = vshrl.u32 %v187, 7
    %v189 = vsub.s32 0, %v188
    %v190 = vrot.slane %v186, %v189
    %v191 = vadd.f32 %v181, %v190
    %v192 = vmax.f32 %v191, 0.0
    %v193 = vld [vmem:[%s2 + $0x1] sm:$0x1]
    %v194 = vld [vmem:[%s2 + $0x2] sm:$0x1]
    %v195 = vlaneseq
    %v196 = vand.u32 %v195, 127
    %vm197 = vcmp.lt.s32.totalorder %v196, 16
    %v198 = vsel %vm197, 1, 0
    %vm199 = vcmp.eq.s32.totalorder %v198, 1
    %v200 = vsel %vm199, %v192, 0.0
    %vm201 = vcmask 261120
    %v202 = vsel %vm201, %v192, 0.0
    %203 = vadd.xlane.f32.xlu0 %v202
    %v204 = vpop.xlane.xlu0 %203
    %v205 = vsel %vm201, %v200, 0.0
    %206 = vadd.xlane.f32.xlu0 %v205
    %v207 = vpop.xlane.xlu0 %206
    %v208 = vmul.f32 %v207, 0.0625
    %v209 = vsub.f32 %v204, %v207
    %v210 = vmul.f32 %v209, 0.0625
    %v211 = vsel %vm199, %v208, %v210
    %v212 = vsub.f32 %v192, %v211
    %v213 = vsel %vm199, %v212, 0.0
    %v214 = vmul.f32 %v212, %v212
    %v215 = vsel %vm201, %v214, 0.0
    %216 = vadd.xlane.f32.xlu0 %v215
    %v217 = vpop.xlane.xlu0 %216
    %v218 = vmul.f32 %v213, %v213
    %v219 = vsel %vm201, %v218, 0.0
    %220 = vadd.xlane.f32.xlu0 %v219
    %v221 = vpop.xlane.xlu0 %220
    %v222 = vmul.f32 %v221, 0.0625
    %v223 = vsub.f32 %v217, %v221
    %v224 = vmul.f32 %v223, 0.0625
    %v225 = vsel %vm199, %v222, %v224
    %v226 = vadd.f32 %v225, 1e-05
    %v227 = vrsqrt.pop %v226
    %v228 = vmul.f32 %v212, %v227
    %v229 = vlaneseq
    %v230 = vshrl.u32 %v229, 7
    %v231 = vsub.s32 0, %v230
    %v232 = vrot.slane %v193, %v231
    %v233 = vmul.f32 %v228, %v232
    %v234 = vlaneseq
    %v235 = vshrl.u32 %v234, 7
    %v236 = vsub.s32 0, %v235
    %v237 = vrot.slane %v194, %v236
    %v238 = vadd.f32 %v233, %v237
    %v239 = vpack.c.bf16 %v238, %v238
    %v240 = vld [vmem:[#allocation7] sm:$0xf]
    %v241 = vld [vmem:[#allocation7 + $0x4] sm:$0xf]
    %v242 = vld [vmem:[#allocation7 + $0x8] sm:$0xf]
    %v243 = vld [vmem:[#allocation7 + $0xc] sm:$0xf]
    %v244 = vld [vmem:[%s2 + $0x3] sm:$0x1]
    %v245 = vlaneseq
    %v246 = vshrl.u32 %v245, 7
    %v247 = vsub.s32 0, %v246
    %v248 = vrot.slane %v244, %v247
    %v253 = vunpack.c.l.b16 %v240
    %v254 = vunpack.c.l.b16 %v241
    %v255 = vunpack.c.l.b16 %v242
    %v256 = vunpack.c.l.b16 %v243
    %v257 = vpack.c.b16 %v254, %v253
    %v258 = vpack.c.b16 %v256, %v255
    %v262 = vsel %vm201, %v239, 0
    %264 = vmatprep.subr.bf16.mxu0 0
    %265 = vmatpush1.bf16.msra.mxu0 %v257
    %266 = vmatprep.subr.bf16.mxu0 0
    %267 = vmatpush1.bf16.msra.mxu0 %v258
    %268 = vmatprep.subr.bf16.mxu0 0
    %269 = vmatpush1.bf16.msra.mxu0 0
    %270 = vmatprep.subr.bf16.mxu0 0
    %271 = vmatpush1.bf16.msra.mxu0 0
    %272 = vmatprep.subr.bf16.mxu0 0
    %273 = vmatpush1.bf16.msra.mxu0 0
    %274 = vmatprep.subr.bf16.mxu0 0
    %275 = vmatpush1.bf16.msra.mxu0 0
    %276 = vmatprep.subr.bf16.mxu0 0
    %277 = vmatpush1.bf16.msra.mxu0 0
    %278 = vmatprep.subr.bf16.mxu0 0
    %279 = vmatpush1.bf16.msra.mxu0 0
    %280 = vmatprep.subr.bf16.mxu0 0
    %281 = vmatpush1.bf16.msra.mxu0 0
    %282 = vmatprep.subr.bf16.mxu0 0
    %283 = vmatpush1.bf16.msra.mxu0 0
    %284 = vmatprep.subr.bf16.mxu0 0
    %285 = vmatpush1.bf16.msra.mxu0 0
    %286 = vmatprep.subr.bf16.mxu0 0
    %287 = vmatpush1.bf16.msra.mxu0 0
    %288 = vmatprep.subr.bf16.mxu0 0
    %289 = vmatpush1.bf16.msra.mxu0 0
    %290 = vmatprep.subr.bf16.mxu0 0
    %291 = vmatpush1.bf16.msra.mxu0 0
    %292 = vmatprep.subr.bf16.mxu0 0
    %293 = vmatpush1.bf16.msra.mxu0 0
    %294 = vmatprep.subr.bf16.mxu0 0
    %295 = vmatpush1.bf16.msra.mxu0 0
    %296 = vmatprep.mubr.bf16.mxu0 0
    %297 = vmatmul.mubr.bf16.gmra.mrb[0].mxu0 %v262
    %v298 = vpop.f32.mrb[0].mxu0
    %v299 = vadd.f32 %v248, %v298
    %v300 = vpop.f32.mrb[0].mxu0
    %v301 = vpop.f32.mrb[0].mxu0
    %v302 = vpop.f32.mrb[0].mxu0
    %303 = vdwg.mxu0
    %v304 = vmax.f32 %v299, 0.0
    %v305 = vld [vmem:[%s2 + $0x4] sm:$0x1]
    %v306 = vld [vmem:[%s2 + $0x5] sm:$0x1]
    %vm307 = vcmp.lt.s32.totalorder %v196, 32
    %v308 = vsel %vm307, 1, 0
    %vm309 = vcmp.eq.s32.totalorder %v308, 1
    %v310 = vsel %vm309, %v304, 0.0
    %vm311 = vcmask 523264
    %v312 = vsel %vm311, %v304, 0.0
    %313 = vadd.xlane.f32.xlu0 %v312
    %v314 = vpop.xlane.xlu0 %313
    %v315 = vsel %vm311, %v310, 0.0
    %316 = vadd.xlane.f32.xlu0 %v315
    %v317 = vpop.xlane.xlu0 %316
    %v318 = vmul.f32 %v317, 0.03125
    %v319 = vsub.f32 %v314, %v317
    %v320 = vmul.f32 %v319, 0.03125
    %v321 = vsel %vm309, %v318, %v320
    %v322 = vsub.f32 %v304, %v321
    %v323 = vsel %vm309, %v322, 0.0
    %v324 = vmul.f32 %v322, %v322
    %v325 = vsel %vm311, %v324, 0.0
    %326 = vadd.xlane.f32.xlu0 %v325
    %v327 = vpop.xlane.xlu0 %326
    %v328 = vmul.f32 %v323, %v323
    %v329 = vsel %vm311, %v328, 0.0
    %330 = vadd.xlane.f32.xlu0 %v329
    %v331 = vpop.xlane.xlu0 %330
    %v332 = vmul.f32 %v331, 0.03125
    %v333 = vsub.f32 %v327, %v331
    %v334 = vmul.f32 %v333, 0.03125
    %v335 = vsel %vm309, %v332, %v334
    %v336 = vadd.f32 %v335, 1e-05
    %v337 = vrsqrt.pop %v336
    %v338 = vmul.f32 %v322, %v337
    %v339 = vlaneseq
    %v340 = vshrl.u32 %v339, 7
    %v341 = vsub.s32 0, %v340
    %v342 = vrot.slane %v305, %v341
    %v343 = vmul.f32 %v338, %v342
    %v344 = vlaneseq
    %v345 = vshrl.u32 %v344, 7
    %v346 = vsub.s32 0, %v345
    %v347 = vrot.slane %v306, %v346
    %v348 = vadd.f32 %v343, %v347
    %v349 = vpack.c.bf16 %v348, %v348
    %v350 = vld [vmem:[%s6] sm:$0xf]
    %v351 = vld [vmem:[%s6 + $0x4] sm:$0xf]
    %v352 = vld [vmem:[%s6 + $0x8] sm:$0xf]
    %v353 = vld [vmem:[%s6 + $0xc] sm:$0xf]
    %v354 = vld [vmem:[%s6 + $0x10] sm:$0xf]
    %v355 = vld [vmem:[%s6 + $0x14] sm:$0xf]
    %v356 = vld [vmem:[%s6 + $0x18] sm:$0xf]
    %v357 = vld [vmem:[%s6 + $0x1c] sm:$0xf]
    %v358 = vld [vmem:[%s2 + $0x6] sm:$0x1]
    %v359 = vlaneseq
    %v360 = vshrl.u32 %v359, 7
    %v361 = vsub.s32 0, %v360
    %v362 = vrot.slane %v358, %v361
    %v371 = vunpack.c.l.b16 %v350
    %v372 = vunpack.c.l.b16 %v351
    %v373 = vunpack.c.l.b16 %v352
    %v374 = vunpack.c.l.b16 %v353
    %v375 = vunpack.c.l.b16 %v354
    %v376 = vunpack.c.l.b16 %v355
    %v377 = vunpack.c.l.b16 %v356
    %v378 = vunpack.c.l.b16 %v357
    %v379 = vpack.c.b16 %v372, %v371
    %v380 = vpack.c.b16 %v374, %v373
    %v381 = vpack.c.b16 %v376, %v375
    %v382 = vpack.c.b16 %v378, %v377
    %v388 = vsel %vm311, %v349, 0
    %390 = vmatprep.subr.bf16.mxu0 0
    %391 = vmatpush1.bf16.msra.mxu0 %v379
    %392 = vmatprep.subr.bf16.mxu0 0
    %393 = vmatpush1.bf16.msra.mxu0 %v380
    %394 = vmatprep.subr.bf16.mxu0 0
    %395 = vmatpush1.bf16.msra.mxu0 %v381
    %396 = vmatprep.subr.bf16.mxu0 0
    %397 = vmatpush1.bf16.msra.mxu0 %v382
    %398 = vmatprep.subr.bf16.mxu0 0
    %399 = vmatpush1.bf16.msra.mxu0 0
    %400 = vmatprep.subr.bf16.mxu0 0
    %401 = vmatpush1.bf16.msra.mxu0 0
    %402 = vmatprep.subr.bf16.mxu0 0
    %403 = vmatpush1.bf16.msra.mxu0 0
    %404 = vmatprep.subr.bf16.mxu0 0
    %405 = vmatpush1.bf16.msra.mxu0 0
    %406 = vmatprep.subr.bf16.mxu0 0
    %407 = vmatpush1.bf16.msra.mxu0 0
    %408 = vmatprep.subr.bf16.mxu0 0
    %409 = vmatpush1.bf16.msra.mxu0 0
    %410 = vmatprep.subr.bf16.mxu0 0
    %411 = vmatpush1.bf16.msra.mxu0 0
    %412 = vmatprep.subr.bf16.mxu0 0
    %413 = vmatpush1.bf16.msra.mxu0 0
    %414 = vmatprep.subr.bf16.mxu0 0
    %415 = vmatpush1.bf16.msra.mxu0 0
    %416 = vmatprep.subr.bf16.mxu0 0
    %417 = vmatpush1.bf16.msra.mxu0 0
    %418 = vmatprep.subr.bf16.mxu0 0
    %419 = vmatpush1.bf16.msra.mxu0 0
    %420 = vmatprep.subr.bf16.mxu0 0
    %421 = vmatpush1.bf16.msra.mxu0 0
    %422 = vmatprep.mubr.bf16.mxu0 0
    %423 = vmatmul.mubr.bf16.gmra.mrb[0].mxu0 %v388
    %v424 = vpop.f32.mrb[0].mxu0
    %v425 = vadd.f32 %v362, %v424
    %v426 = vpop.f32.mrb[0].mxu0
    %v427 = vpop.f32.mrb[0].mxu0
    %v428 = vpop.f32.mrb[0].mxu0
    %429 = vdwg.mxu0
    %v430 = vmax.f32 %v425, 0.0
    %v431 = vld [vmem:[%s2 + $0x7] sm:$0x1]
    %v432 = vld [vmem:[%s2 + $0x8] sm:$0x1]
    %v433 = vsel %vm309, %v430, 0.0
    %v434 = vsel %vm311, %v430, 0.0
    %435 = vadd.xlane.f32.xlu0 %v434
    %v436 = vpop.xlane.xlu0 %435
    %v437 = vsel %vm311, %v433, 0.0
    %438 = vadd.xlane.f32.xlu0 %v437
    %v439 = vpop.xlane.xlu0 %438
    %v440 = vmul.f32 %v439, 0.03125
    %v441 = vsub.f32 %v436, %v439
    %v442 = vmul.f32 %v441, 0.03125
    %v443 = vsel %vm309, %v440, %v442
    %v444 = vsub.f32 %v430, %v443
    %v445 = vsel %vm309, %v444, 0.0
    %v446 = vmul.f32 %v444, %v444
    %v447 = vsel %vm311, %v446, 0.0
    %448 = vadd.xlane.f32.xlu0 %v447
    %v449 = vpop.xlane.xlu0 %448
    %v450 = vmul.f32 %v445, %v445
    %v451 = vsel %vm311, %v450, 0.0
    %452 = vadd.xlane.f32.xlu0 %v451
    %v453 = vpop.xlane.xlu0 %452
    %v454 = vmul.f32 %v453, 0.03125
    %v455 = vsub.f32 %v449, %v453
    %v456 = vmul.f32 %v455, 0.03125
    %v457 = vsel %vm309, %v454, %v456
    %v458 = vadd.f32 %v457, 1e-05
    %v459 = vrsqrt.pop %v458
    %v460 = vmul.f32 %v444, %v459
    %v461 = vlaneseq
    %v462 = vshrl.u32 %v461, 7
    %v463 = vsub.s32 0, %v462
    %v464 = vrot.slane %v431, %v463
    %v465 = vmul.f32 %v460, %v464
    %v466 = vlaneseq
    %v467 = vshrl.u32 %v466, 7
    %v468 = vsub.s32 0, %v467
    %v469 = vrot.slane %v432, %v468
    %v470 = vadd.f32 %v465, %v469
    %v471 = vpack.c.bf16 %v470, %v470
    %v472 = vld [vmem:[%s7] sm:$0xf]
    %v473 = vld [vmem:[%s7 + $0x4] sm:$0xf]
    %v474 = vld [vmem:[%s7 + $0x8] sm:$0xf]
    %v475 = vld [vmem:[%s7 + $0xc] sm:$0xf]
    %v476 = vld [vmem:[%s7 + $0x10] sm:$0xf]
    %v477 = vld [vmem:[%s7 + $0x14] sm:$0xf]
    %v478 = vld [vmem:[%s7 + $0x18] sm:$0xf]
    %v479 = vld [vmem:[%s7 + $0x1c] sm:$0xf]
    %v480 = vld [vmem:[%s2 + $0x9] sm:$0x1]
    %v481 = vlaneseq
    %v482 = vshrl.u32 %v481, 7
    %v483 = vsub.s32 0, %v482
    %v484 = vrot.slane %v480, %v483
    %v493 = vunpack.c.l.b16 %v472
    %v494 = vunpack.c.l.b16 %v473
    %v495 = vunpack.c.l.b16 %v474
    %v496 = vunpack.c.l.b16 %v475
    %v497 = vunpack.c.l.b16 %v476
    %v498 = vunpack.c.l.b16 %v477
    %v499 = vunpack.c.l.b16 %v478
    %v500 = vunpack.c.l.b16 %v479
    %v501 = vpack.c.b16 %v494, %v493
    %v502 = vpack.c.b16 %v496, %v495
    %v503 = vpack.c.b16 %v498, %v497
    %v504 = vpack.c.b16 %v500, %v499
    %v510 = vsel %vm311, %v471, 0
    %512 = vmatprep.subr.bf16.mxu0 0
    %513 = vmatpush1.bf16.msra.mxu0 %v501
    %514 = vmatprep.subr.bf16.mxu0 0
    %515 = vmatpush1.bf16.msra.mxu0 %v502
    %516 = vmatprep.subr.bf16.mxu0 0
    %517 = vmatpush1.bf16.msra.mxu0 %v503
    %518 = vmatprep.subr.bf16.mxu0 0
    %519 = vmatpush1.bf16.msra.mxu0 %v504
    %520 = vmatprep.subr.bf16.mxu0 0
    %521 = vmatpush1.bf16.msra.mxu0 0
    %522 = vmatprep.subr.bf16.mxu0 0
    %523 = vmatpush1.bf16.msra.mxu0 0
    %524 = vmatprep.subr.bf16.mxu0 0
    %525 = vmatpush1.bf16.msra.mxu0 0
    %526 = vmatprep.subr.bf16.mxu0 0
    %527 = vmatpush1.bf16.msra.mxu0 0
    %528 = vmatprep.subr.bf16.mxu0 0
    %529 = vmatpush1.bf16.msra.mxu0 0
    %530 = vmatprep.subr.bf16.mxu0 0
    %531 = vmatpush1.bf16.msra.mxu0 0
    %532 = vmatprep.subr.bf16.mxu0 0
    %533 = vmatpush1.bf16.msra.mxu0 0
    %534 = vmatprep.subr.bf16.mxu0 0
    %535 = vmatpush1.bf16.msra.mxu0 0
    %536 = vmatprep.subr.bf16.mxu0 0
    %537 = vmatpush1.bf16.msra.mxu0 0
    %538 = vmatprep.subr.bf16.mxu0 0
    %539 = vmatpush1.bf16.msra.mxu0 0
    %540 = vmatprep.subr.bf16.mxu0 0
    %541 = vmatpush1.bf16.msra.mxu0 0
    %542 = vmatprep.subr.bf16.mxu0 0
    %543 = vmatpush1.bf16.msra.mxu0 0
    %544 = vmatprep.mubr.bf16.mxu0 0
    %545 = vmatmul.mubr.bf16.gmra.mrb[0].mxu0 %v510
    %v546 = vpop.f32.mrb[0].mxu0
    %v547 = vadd.f32 %v484, %v546
    %v548 = vpop.f32.mrb[0].mxu0
    %v549 = vpop.f32.mrb[0].mxu0
    %v550 = vpop.f32.mrb[0].mxu0
    %551 = vdwg.mxu0
    %vm552 = vcmask 15360
    %553 = vst.msk [vmem:[%s8] sm:$0xff] %vm552, %v547
    // Predicated region
    $region50: #{forward.1} parent=1 // pred_check
      _
    $region51: #{forward.1} parent=1 // pred_check_branch
      %555 = sbr.rel (0) target = $region53
    $region52: #{forward.1} parent=1 // pred_region
      _
    $region53: #{forward.1} parent=1 // pred_fallthru
      _
    // Predicated region
    $region54: #{forward.1} parent=1 // pred_check
      _
    $region55: #{forward.1} parent=1 // pred_check_branch
      %557 = sbr.rel (0) target = $region57
    $region56: #{forward.1} parent=1 // pred_region
      _
    $region57: #{forward.1} parent=1 // pred_fallthru
      _
    %558 = vsyncpa [#allocation3], 1
    %559 = vsyncpa [#allocation5], 1
    %560 = vsyncpa [#allocation8], 1

</llo_original>
